<compile_context>
chip_gen: v7x
topology: tpu7x:2x2x1
jax: 0.10.0
libtpu: 0.0.40
codegen_flags: <defaults>
</compile_context>

<pallas_src>
import functools

import jax
import jax.numpy as jnp
from jax import lax
from jax.experimental import pallas as pl
from jax.experimental.pallas import tpu as pltpu


# ---------------------------------------------------------------------------
# Chip-derived sizing (import-time query; conservative fallback if unavailable).
# ---------------------------------------------------------------------------
try:
    _VMEM_CAPACITY = int(pltpu.get_tpu_info().vmem_capacity_bytes)
except Exception:  # query unavailable -> assume the smallest (v7x-like) VMEM
    _VMEM_CAPACITY = 64 * 1024 * 1024

_VMEM_INPUT_BUDGET = int(0.35 * _VMEM_CAPACITY)   # double-buffered inputs + f32 temps
_VMEM_LIMIT_BYTES = int(0.55 * _VMEM_CAPACITY)    # scoped-VMEM limit handed to Mosaic

# Per-grid-step HBM payload target: 64 MiB VMEM => v7x (highest HBM BW) => larger.
_TARGET_STEP_BYTES = (4 * 1024 * 1024 if _VMEM_CAPACITY <= 64 * 1024 * 1024
                      else 2 * 1024 * 1024)


def _make_dice_kernel(*, smooth, p, input_logits, three_d, extent, step, need_mask):
    """Builds the streaming-reduction kernel.

    three_d=True : blocks are (N, R, 128) row slabs, accumulators (N, 8, 128).
    three_d=False: blocks are (N, tile) lane slabs ((N, C, tile) for logits),
                   accumulators (N, 1).
    extent/step  : rows & rows-per-step (3-D) or L & lane-tile (2-D); only used
                   by the ragged-tail mask on the final grid step.
    """
    if p not in (1, 2):
        raise NotImplementedError("BinaryDiceLoss only supports p=1 or p=2")

    def kernel(*refs):
        if three_d and input_logits:
            l0_ref, l1_ref, gt_ref, out_ref, num_acc, den_acc = refs
        elif three_d:
            l1_ref, gt_ref, out_ref, num_acc, den_acc = refs
        else:
            lg_ref, gt_ref, out_ref, num_acc, den_acc = refs

        i = pl.program_id(0)
        last = pl.num_programs(0) - 1

        @pl.when(i == 0)
        def _():
            num_acc[...] = jnp.zeros_like(num_acc)
            den_acc[...] = jnp.zeros_like(den_acc)

        def accumulate(masked):
            gt = gt_ref[...].astype(jnp.float32)

            if input_logits:
                if three_d:
                    d = (l1_ref[...].astype(jnp.float32)
                         - l0_ref[...].astype(jnp.float32))
                else:
                    d = (lg_ref[:, 1, :].astype(jnp.float32)
                         - lg_ref[:, 0, :].astype(jnp.float32))
                # softmax(logits, axis=C)[:, 1] with C == 2 is sigmoid(l1 - l0);
                # the tanh identity keeps the transcendental on the EUP and
                # avoids a per-element f32 VALU divide.
                prob = 0.5 * (jnp.tanh(0.5 * d) + 1.0)
            else:
                if three_d:
                    prob = l1_ref[...].astype(jnp.float32)
                else:
                    prob = lg_ref[:, 1, :].astype(jnp.float32)

            if masked:
                # Only the final (partial) block runs this path.
                pos = i * step + lax.broadcasted_iota(jnp.int32, prob.shape, 1)
                valid = pos < extent
                prob = jnp.where(valid, prob, 0.0)
                gt = jnp.where(valid, gt, 0.0)

            num = prob * gt
            if p == 1:
                den = prob + gt
            else:  # p == 2; gt*gt kept for exact semantics w.r.t. non-binary gt
                den = prob * prob + gt * gt

            if three_d:
                groups = step // 8

                def fold(x):  # (N, step, 128) -> (N, 8, 128) via pure VPU adds
                    acc = x[:, 0:8, :]
                    for g in range(1, groups):
                        acc = acc + x[:, g * 8:(g + 1) * 8, :]
                    return acc

                num_acc[...] += fold(num)
                den_acc[...] += fold(den)
            else:
                num_acc[...] += jnp.sum(num, axis=1, keepdims=True)
                den_acc[...] += jnp.sum(den, axis=1, keepdims=True)

        if need_mask:
            @pl.when(i != last)
            def _():
                accumulate(False)

            @pl.when(i == last)
            def _():
                accumulate(True)
        else:
            accumulate(False)

        @pl.when(i == last)
        def _():
            if three_d:
                # Single deferred XLU reduce of the vreg-shaped accumulators.
                num = jnp.sum(jnp.sum(num_acc[...], axis=1), axis=1, keepdims=True)
                den = jnp.sum(jnp.sum(den_acc[...], axis=1), axis=1, keepdims=True)
            else:
                num = num_acc[...]
                den = den_acc[...]
            nominator = 2.0 * num + smooth                 # (N, 1)
            denominator = den + smooth                     # (N, 1)
            loss = 1.0 - nominator / denominator           # exact divide, N elems
            out_ref[...] = jnp.mean(loss, keepdims=True)   # (1, 1): reduction='mean'

    return kernel


@functools.partial(jax.jit,
                   static_argnames=("smooth", "p", "input_logits",
                                    "rows_per_step", "lane_tile"))
def binary_dice_loss(logits, gt_float, *, smooth=1.0, p=1, input_logits=True,
                     rows_per_step=None, lane_tile=None):
    """Pallas-TPU forward of BinaryDiceLoss (reduction='mean')."""
    if p not in (1, 2):
        raise NotImplementedError("BinaryDiceLoss only supports p=1 or p=2")
    assert logits.shape[0] == gt_float.shape[0], "batch size error!"
    N = int(logits.shape[0])
    C = int(logits.shape[1])
    if input_logits:
        if C != 2:
            # TODO(synk): stream all C channels and do a full softmax when C > 2.
            raise NotImplementedError(
                "input_logits=True kernel uses sigmoid(l1-l0); requires C == 2")
    else:
        assert C >= 2, "needs a channel-1 to select"

    L = 1
    for d in logits.shape[2:]:
        L *= int(d)

    itemsize_l = logits.dtype.itemsize
    itemsize_g = gt_float.dtype.itemsize
    rows = L // 128
    use_3d = (L % 128 == 0) and (rows >= 8)

    if use_3d:
        # ---------------- main path: [N, C, L/128, 128] layout -----------------
        n_logit_streams = 2 if input_logits else 1
        bytes_per_row = N * 128 * (n_logit_streams * itemsize_l + itemsize_g)
        # Double-buffered input blocks + headroom for f32 intermediates per row.
        vmem_per_row = 2 * bytes_per_row + 6 * N * 128 * 4
        r = min(max(8, _TARGET_STEP_BYTES // bytes_per_row),
                max(8, _VMEM_INPUT_BUDGET // vmem_per_row),
                (rows // 8) * 8)
        if rows_per_step is not None:
            r = min(int(rows_per_step), (rows // 8) * 8)
        r = max(8, (r // 8) * 8)
        n_tiles = -(-rows // r)
        need_mask = (n_tiles * r) != rows

        lg = logits.reshape(N, C, rows, 128)      # metadata-only reshape
        gt = gt_float.reshape(N, rows, 128)       # metadata-only reshape

        def ch_spec(c):
            return pl.BlockSpec((N, pl.Squeezed(), r, 128),
                                lambda i, _c=c: (0, _c, i, 0))

        gt_spec = pl.BlockSpec((N, r, 128), lambda i: (0, i, 0))
        if input_logits:
            in_specs = [ch_spec(0), ch_spec(1), gt_spec]
            operands = (lg, lg, gt)
        else:
            in_specs = [ch_spec(1), gt_spec]
            operands = (lg, gt)
        acc_shape = (N, 8, 128)
        extent, step = rows, r
        bytes_accessed = N * L * (n_logit_streams * itemsize_l + itemsize_g)
    else:
        # -------- fallback: ragged L, or fewer than 8 rows of 128 lanes --------
        n_pad = -(-N // 8) * 8                         # sublane padding in VMEM
        bytes_per_pos = C * itemsize_l + itemsize_g    # full-C logits block
        vmem_per_lane = 2 * n_pad * bytes_per_pos + 6 * n_pad * 4
        tile = min(max(128, _TARGET_STEP_BYTES // max(N * bytes_per_pos, 1)),
                   max(128, _VMEM_INPUT_BUDGET // vmem_per_lane))
        tile = max(128, (tile // 128) * 128)
        if lane_tile is not None:
            tile = max(128, (int(lane_tile) // 128) * 128)
        if tile >= L:
            tile, n_tiles, need_mask = L, 1, False     # single full-extent block
        else:
            n_tiles = -(-L // tile)
            need_mask = (n_tiles * tile) != L

        lg = logits.reshape(N, C, L)
        gt = gt_float.reshape(N, L)
        # Sublane block dim equals the array dim (C / N) -> (8,128) rule trivially
        # satisfied; the kernel selects channels 0/1 from the loaded block.
        lg_spec = pl.BlockSpec((N, C, tile), lambda i: (0, 0, i))
        gt_spec = pl.BlockSpec((N, tile), lambda i: (0, i))
        in_specs = [lg_spec, gt_spec]
        operands = (lg, gt)
        acc_shape = (N, 1)
        extent, step = L, tile
        bytes_accessed = N * L * bytes_per_pos

    kernel = _make_dice_kernel(smooth=float(smooth), p=int(p),
                               input_logits=bool(input_logits), three_d=use_3d,
                               extent=extent, step=step, need_mask=need_mask)

    cost = pl.CostEstimate(
        flops=int((10 if input_logits else 6) * N * L),
        transcendentals=int(N * L) if input_logits else 0,
        bytes_accessed=int(bytes_accessed) + 4,
    )

    # TODO(synk): on v7x (2 TensorCores) add a leading "parallel" grid axis that
    # halves the row range with partial (num, den) outputs combined in the
    # wrapper; likewise tile N with a parallel axis when N is so large that even
    # an 8-row step exceeds the VMEM budget.

    out = pl.pallas_call(
        kernel,
        out_shape=jax.ShapeDtypeStruct((1, 1), jnp.float32),
        grid_spec=pltpu.PrefetchScalarGridSpec(
            num_scalar_prefetch=0,
            grid=(n_tiles,),
            in_specs=in_specs,
            # Constant block index across the (single, reduction) grid axis ->
            # VMEM-resident output, written only on the final step.
            out_specs=pl.BlockSpec((1, 1), lambda i: (0, 0)),
            scratch_shapes=[
                pltpu.VMEM(acc_shape, jnp.float32),   # nominator accumulator
                pltpu.VMEM(acc_shape, jnp.float32),   # denominator accumulator
            ],
        ),
        compiler_params=pltpu.CompilerParams(
            dimension_semantics=("arbitrary",),
            vmem_limit_bytes=_VMEM_LIMIT_BYTES,
        ),
        cost_estimate=cost,
    )(*operands)
    return out[0, 0]


def _reference(logits, gt_float, smooth=1.0, p=1, input_logits=True):
    N = logits.shape[0]
    if input_logits:
        probs = jax.nn.softmax(logits.astype(jnp.float32), axis=1)[:, 1]
    else:
        probs = logits[:, 1].astype(jnp.float32)
    probs = probs.reshape(N, -1)
    gt = gt_float.reshape(N, -1).astype(jnp.float32)
    nom = 2.0 * jnp.sum(probs * gt, axis=1) + smooth
    if p == 1:
        den = jnp.sum(probs + gt, axis=1) + smooth
    else:
        den = jnp.sum(probs * probs + gt * gt, axis=1) + smooth
    return jnp.mean(1.0 - nom / den)


if __name__ == "__main__":
    key = jax.random.PRNGKey(0)
    k1, k2, k3, k4, k5, k6, k7, k8 = jax.random.split(key, 8)

    # Case 1: main 3-D path, auto tile sizing (single step, 3 fold groups).
    # N=2, C=2, 64x48 spatial -> L=3072, rows=24.  softmax path, p=1.
    N, C, H, W = 2, 2, 64, 48
    logits = jax.random.normal(k1, (N, C, H, W), dtype=jnp.float32)
    gt = (jax.random.uniform(k2, (N, H, W)) > 0.5).astype(jnp.float32)
    loss = jax.block_until_ready(
        binary_dice_loss(logits, gt, smooth=1.0, p=1, input_logits=True))
    ref = _reference(logits, gt, smooth=1.0, p=1, input_logits=True)
    assert jnp.allclose(loss, ref, atol=1e-5, rtol=1e-5), (loss, ref)

    # Case 2: 3-D path with forced rows_per_step=8 -> 2 grid steps and a partial
    # last block (row mask), odd batch, softmax path, p=2.  L=1536, rows=12.
    N2, C2, H2, W2 = 3, 2, 48, 32
    logits2 = jax.random.normal(k3, (N2, C2, H2, W2), dtype=jnp.float32)
    gt2 = (jax.random.uniform(k4, (N2, H2, W2)) > 0.5).astype(jnp.float32)
    loss2 = jax.block_until_ready(
        binary_dice_loss(logits2, gt2, smooth=1.0, p=2, input_logits=True,
                         rows_per_step=8))
    ref2 = _reference(logits2, gt2, smooth=1.0, p=2, input_logits=True)
    assert jnp.allclose(loss2, ref2, atol=1e-5, rtol=1e-5), (loss2, ref2)

    # Case 3: 2-D fallback, ragged L (10x20 = 200), forced 128-lane tile ->
    # 2 steps + lane mask on the last, probability (input_logits=False) path.
    N3, C3, H3, W3 = 2, 2, 10, 20
    raw3 = jax.random.uniform(k5, (N3, C3, H3, W3), dtype=jnp.float32) + 0.1
    probs3 = raw3 / jnp.sum(raw3, axis=1, keepdims=True)
    gt3 = (jax.random.uniform(k6, (N3, H3, W3)) > 0.5).astype(jnp.float32)
    loss3 = jax.block_until_ready(
        binary_dice_loss(probs3, gt3, smooth=1.0, p=2, input_logits=False,
                         lane_tile=128))
    ref3 = _reference(probs3, gt3, smooth=1.0, p=2, input_logits=False)
    assert jnp.allclose(loss3, ref3, atol=1e-5, rtol=1e-5), (loss3, ref3)

    # Case 4: 2-D fallback, L % 128 == 0 but fewer than 8 rows (16x16 -> L=256),
    # single full-extent block, softmax path, p=1.
    N4, C4, H4, W4 = 2, 2, 16, 16
    logits4 = jax.random.normal(k7, (N4, C4, H4, W4), dtype=jnp.float32)
    gt4 = (jax.random.uniform(k8, (N4, H4, W4)) > 0.5).astype(jnp.float32)
    loss4 = jax.block_until_ready(
        binary_dice_loss(logits4, gt4, smooth=1.0, p=1, input_logits=True))
    ref4 = _reference(logits4, gt4, smooth=1.0, p=1, input_logits=True)
    assert jnp.allclose(loss4, ref4, atol=1e-5, rtol=1e-5), (loss4, ref4)

    print("KERNEL_OK")
</pallas_src>

<mosaic_0001>
module attributes {stable_mosaic.version = 11 : i64} {
  func.func @kernel(%arg0: i32, %arg1: memref<2x1x24x128xf32, #tpu.memory_space<vmem>>, %arg2: memref<2x1x24x128xf32, #tpu.memory_space<vmem>>, %arg3: memref<2x24x128xf32, #tpu.memory_space<vmem>>, %arg4: memref<1x1xf32, #tpu.memory_space<vmem>>, %arg5: memref<2x8x128xf32, #tpu.memory_space<vmem>>, %arg6: memref<2x8x128xf32, #tpu.memory_space<vmem>>) attributes {dimension_semantics = [#tpu.dimension_semantics<arbitrary>], iteration_bounds = array<i64: 1>, scalar_prefetch = 0 : i64, scratch_operands = 2 : i64, tpu.core_type = #tpu.core_type<tc>, window_params = [{transform_indices = @transform_0, window_bounds = array<i64: 2, 1, 24, 128>}, {transform_indices = @transform_1, window_bounds = array<i64: 2, 1, 24, 128>}, {transform_indices = @transform_2, window_bounds = array<i64: 2, 24, 128>}, {pipeline_mode = #tpu.pipeline_mode<synchronous>, transform_indices = @transform_3, window_bounds = array<i64: 1, 1>}]} {
    %c0_i32 = arith.constant 0 : i32
    %0 = arith.cmpi eq, %arg0, %c0_i32 : i32
    %1 = arith.extui %0 : i1 to i32
    %c0_i32_0 = arith.constant 0 : i32
    %2 = arith.cmpi ne, %1, %c0_i32_0 : i32
    scf.if %2 {
      %cst_27 = arith.constant 0.000000e+00 : f32
      %37 = vector.broadcast %cst_27 : f32 to vector<2x8x128xf32>
      %c0_28 = arith.constant 0 : index
      %c0_29 = arith.constant 0 : index
      %c0_30 = arith.constant 0 : index
      %38 = vector.load %arg5[%c0_28, %c0_29, %c0_30] : memref<2x8x128xf32, #tpu.memory_space<vmem>>, vector<2x8x128xf32>
      tpu.vector_store %arg5[%c0_28, %c0_29, %c0_30], %37 {strides = array<i32>} : memref<2x8x128xf32, #tpu.memory_space<vmem>>, vector<2x8x128xf32>,
      %cst_31 = arith.constant 0.000000e+00 : f32
      %39 = vector.broadcast %cst_31 : f32 to vector<2x8x128xf32>
      %c0_32 = arith.constant 0 : index
      %c0_33 = arith.constant 0 : index
      %c0_34 = arith.constant 0 : index
      %40 = vector.load %arg6[%c0_32, %c0_33, %c0_34] : memref<2x8x128xf32, #tpu.memory_space<vmem>>, vector<2x8x128xf32>
      tpu.vector_store %arg6[%c0_32, %c0_33, %c0_34], %39 {strides = array<i32>} : memref<2x8x128xf32, #tpu.memory_space<vmem>>, vector<2x8x128xf32>,
    } else {
    }
    %c0 = arith.constant 0 : index
    %c0_1 = arith.constant 0 : index
    %c0_2 = arith.constant 0 : index
    %3 = vector.load %arg3[%c0, %c0_1, %c0_2] : memref<2x24x128xf32, #tpu.memory_space<vmem>>, vector<2x24x128xf32>
    %c0_3 = arith.constant 0 : index
    %c0_4 = arith.constant 0 : index
    %c0_5 = arith.constant 0 : index
    %c0_6 = arith.constant 0 : index
    %4 = vector.load %arg2[%c0_3, %c0_4, %c0_5, %c0_6] : memref<2x1x24x128xf32, #tpu.memory_space<vmem>>, vector<2x1x24x128xf32>
    %5 = vector.shape_cast %4 : vector<2x1x24x128xf32> to vector<2x24x128xf32>
    %c0_7 = arith.constant 0 : index
    %c0_8 = arith.constant 0 : index
    %c0_9 = arith.constant 0 : index
    %c0_10 = arith.constant 0 : index
    %6 = vector.load %arg1[%c0_7, %c0_8, %c0_9, %c0_10] : memref<2x1x24x128xf32, #tpu.memory_space<vmem>>, vector<2x1x24x128xf32>
    %7 = vector.shape_cast %6 : vector<2x1x24x128xf32> to vector<2x24x128xf32>
    %8 = arith.subf %5, %7 : vector<2x24x128xf32>
    %cst = arith.constant 5.000000e-01 : f32
    %9 = vector.broadcast %cst : f32 to vector<2x24x128xf32>
    %10 = arith.mulf %9, %8 : vector<2x24x128xf32>
    %11 = math.tanh %10 : vector<2x24x128xf32>
    %cst_11 = arith.constant 1.000000e+00 : f32
    %12 = vector.broadcast %cst_11 : f32 to vector<2x24x128xf32>
    %13 = arith.addf %11, %12 : vector<2x24x128xf32>
    %cst_12 = arith.constant 5.000000e-01 : f32
    %14 = vector.broadcast %cst_12 : f32 to vector<2x24x128xf32>
    %15 = arith.mulf %14, %13 : vector<2x24x128xf32>
    %16 = arith.mulf %15, %3 : vector<2x24x128xf32>
    %17 = arith.addf %15, %3 : vector<2x24x128xf32>
    %c0_13 = arith.constant 0 : index
    %c0_14 = arith.constant 0 : index
    %c0_15 = arith.constant 0 : index
    %18 = vector.load %arg5[%c0_13, %c0_14, %c0_15] : memref<2x8x128xf32, #tpu.memory_space<vmem>>, vector<2x8x128xf32>
    %19 = vector.extract_strided_slice %16 {offsets = [0, 0, 0], sizes = [2, 8, 128], strides = [1, 1, 1]} : vector<2x24x128xf32> to vector<2x8x128xf32>
    %20 = vector.extract_strided_slice %16 {offsets = [0, 8, 0], sizes = [2, 8, 128], strides = [1, 1, 1]} : vector<2x24x128xf32> to vector<2x8x128xf32>
    %21 = arith.addf %19, %20 : vector<2x8x128xf32>
    %22 = vector.extract_strided_slice %16 {offsets = [0, 16, 0], sizes = [2, 8, 128], strides = [1, 1, 1]} : vector<2x24x128xf32> to vector<2x8x128xf32>
    %23 = arith.addf %21, %22 : vector<2x8x128xf32>
    %24 = arith.addf %18, %23 : vector<2x8x128xf32>
    %c0_16 = arith.constant 0 : index
    %c0_17 = arith.constant 0 : index
    %c0_18 = arith.constant 0 : index
    %25 = vector.load %arg5[%c0_16, %c0_17, %c0_18] : memref<2x8x128xf32, #tpu.memory_space<vmem>>, vector<2x8x128xf32>
    tpu.vector_store %arg5[%c0_16, %c0_17, %c0_18], %24 {strides = array<i32>} : memref<2x8x128xf32, #tpu.memory_space<vmem>>, vector<2x8x128xf32>,
    %c0_19 = arith.constant 0 : index
    %c0_20 = arith.constant 0 : index
    %c0_21 = arith.constant 0 : index
    %26 = vector.load %arg6[%c0_19, %c0_20, %c0_21] : memref<2x8x128xf32, #tpu.memory_space<vmem>>, vector<2x8x128xf32>
    %27 = vector.extract_strided_slice %17 {offsets = [0, 0, 0], sizes = [2, 8, 128], strides = [1, 1, 1]} : vector<2x24x128xf32> to vector<2x8x128xf32>
    %28 = vector.extract_strided_slice %17 {offsets = [0, 8, 0], sizes = [2, 8, 128], strides = [1, 1, 1]} : vector<2x24x128xf32> to vector<2x8x128xf32>
    %29 = arith.addf %27, %28 : vector<2x8x128xf32>
    %30 = vector.extract_strided_slice %17 {offsets = [0, 16, 0], sizes = [2, 8, 128], strides = [1, 1, 1]} : vector<2x24x128xf32> to vector<2x8x128xf32>
    %31 = arith.addf %29, %30 : vector<2x8x128xf32>
    %32 = arith.addf %26, %31 : vector<2x8x128xf32>
    %c0_22 = arith.constant 0 : index
    %c0_23 = arith.constant 0 : index
    %c0_24 = arith.constant 0 : index
    %33 = vector.load %arg6[%c0_22, %c0_23, %c0_24] : memref<2x8x128xf32, #tpu.memory_space<vmem>>, vector<2x8x128xf32>
    tpu.vector_store %arg6[%c0_22, %c0_23, %c0_24], %32 {strides = array<i32>} : memref<2x8x128xf32, #tpu.memory_space<vmem>>, vector<2x8x128xf32>,
    %c0_i32_25 = arith.constant 0 : i32
    %34 = arith.cmpi eq, %arg0, %c0_i32_25 : i32
    %35 = arith.extui %34 : i1 to i32
    %c0_i32_26 = arith.constant 0 : i32
    %36 = arith.cmpi ne, %35, %c0_i32_26 : i32
    scf.if %36 {
      %c0_27 = arith.constant 0 : index
      %c0_28 = arith.constant 0 : index
      %c0_29 = arith.constant 0 : index
      %37 = vector.load %arg5[%c0_27, %c0_28, %c0_29] : memref<2x8x128xf32, #tpu.memory_space<vmem>>, vector<2x8x128xf32>
      %cst_30 = arith.constant dense<0.000000e+00> : vector<2x128xf32>
      %38 = vector.multi_reduction <add>, %37, %cst_30 [1] : vector<2x8x128xf32> to vector<2x128xf32>
      %cst_31 = arith.constant dense<0.000000e+00> : vector<2xf32>
      %39 = vector.multi_reduction <add>, %38, %cst_31 [1] : vector<2x128xf32> to vector<2xf32>
      %40 = vector.shape_cast %39 : vector<2xf32> to vector<2x1xf32>
      %c0_32 = arith.constant 0 : index
      %c0_33 = arith.constant 0 : index
      %c0_34 = arith.constant 0 : index
      %41 = vector.load %arg6[%c0_32, %c0_33, %c0_34] : memref<2x8x128xf32, #tpu.memory_space<vmem>>, vector<2x8x128xf32>
      %cst_35 = arith.constant dense<0.000000e+00> : vector<2x128xf32>
      %42 = vector.multi_reduction <add>, %41, %cst_35 [1] : vector<2x8x128xf32> to vector<2x128xf32>
      %cst_36 = arith.constant dense<0.000000e+00> : vector<2xf32>
      %43 = vector.multi_reduction <add>, %42, %cst_36 [1] : vector<2x128xf32> to vector<2xf32>
      %44 = vector.shape_cast %43 : vector<2xf32> to vector<2x1xf32>
      %cst_37 = arith.constant 2.000000e+00 : f32
      %45 = vector.broadcast %cst_37 : f32 to vector<2x1xf32>
      %46 = arith.mulf %45, %40 : vector<2x1xf32>
      %cst_38 = arith.constant 1.000000e+00 : f32
      %47 = vector.broadcast %cst_38 : f32 to vector<2x1xf32>
      %48 = arith.addf %46, %47 : vector<2x1xf32>
      %cst_39 = arith.constant 1.000000e+00 : f32
      %49 = vector.broadcast %cst_39 : f32 to vector<2x1xf32>
      %50 = arith.addf %44, %49 : vector<2x1xf32>
      %51 = arith.divf %48, %50 : vector<2x1xf32>
      %cst_40 = arith.constant 1.000000e+00 : f32
      %52 = vector.broadcast %cst_40 : f32 to vector<2x1xf32>
      %53 = arith.subf %52, %51 : vector<2x1xf32>
      %54 = vector.shape_cast %53 : vector<2x1xf32> to vector<1x2x1xf32>
      %cst_41 = arith.constant dense<0.000000e+00> : vector<1xf32>
      %55 = vector.multi_reduction <add>, %54, %cst_41 [1, 2] : vector<1x2x1xf32> to vector<1xf32>
      %56 = vector.shape_cast %55 : vector<1xf32> to vector<1x1x1xf32>
      %57 = vector.extract %56[0, 0, 0] : f32 from vector<1x1x1xf32>
      %58 = vector.broadcast %57 : f32 to vector<1x1xf32>
      %cst_42 = arith.constant 2.000000e+00 : f32
      %59 = vector.broadcast %cst_42 : f32 to vector<1x1xf32>
      %60 = arith.divf %58, %59 : vector<1x1xf32>
      %c0_43 = arith.constant 0 : index
      %c0_44 = arith.constant 0 : index
      %61 = vector.load %arg4[%c0_43, %c0_44] : memref<1x1xf32, #tpu.memory_space<vmem>>, vector<1x1xf32>
      tpu.vector_store %arg4[%c0_43, %c0_44], %60 {strides = array<i32>} : memref<1x1xf32, #tpu.memory_space<vmem>>, vector<1x1xf32>,
    } else {
    }
    return
  }
  func.func @transform_0(%arg0: i32) -> (i32, i32, i32, i32) {
    %c0_i32 = arith.constant 0 : i32
    %c0_i32_0 = arith.constant 0 : i32
    %c0_i32_1 = arith.constant 0 : i32
    %c0_i32_2 = arith.constant 0 : i32
    return %c0_i32, %c0_i32_0, %arg0, %c0_i32_1 : i32, i32, i32, i32
  }
  func.func @transform_1(%arg0: i32) -> (i32, i32, i32, i32) {
    %c0_i32 = arith.constant 0 : i32
    %c1_i32 = arith.constant 1 : i32
    %c0_i32_0 = arith.constant 0 : i32
    %c0_i32_1 = arith.constant 0 : i32
    return %c0_i32, %c1_i32, %arg0, %c0_i32_0 : i32, i32, i32, i32
  }
  func.func @transform_2(%arg0: i32) -> (i32, i32, i32) {
    %c0_i32 = arith.constant 0 : i32
    %c0_i32_0 = arith.constant 0 : i32
    %c0_i32_1 = arith.constant 0 : i32
    return %c0_i32, %arg0, %c0_i32_0 : i32, i32, i32
  }
  func.func @transform_3(%arg0: i32) -> (i32, i32) {
    %c0_i32 = arith.constant 0 : i32
    %c0_i32_0 = arith.constant 0 : i32
    %c0_i32_1 = arith.constant 0 : i32
    return %c0_i32, %c0_i32_0 : i32, i32
  }
}

</mosaic_0001>

<llo_original>
// kernel: binary_dice_loss.1
$region0: #{binary_dice_loss.1}
  #allocation0 [shape = 'u32[]', space=smem, size = 0x4, offset = 0x4, fixed_abs, tag = 'smem constant byte address 0x4 - core index']
  #allocation1 [shape = 'u32[144,128]{1,0:T(1,128)}', space=vmem, size = 0x12000, scoped, tag = 'internal scratch']
  #allocation2 [shape = 'f32[2,8,128]{2,1,0:T(8,128)}', space=vmem, size = 0x2000, scoped, tag = 'scratch operand']
  #allocation3 [shape = 'f32[2,8,128]{2,1,0:T(8,128)}', space=vmem, size = 0x2000, scoped, tag = 'scratch operand']
  %s0 = inlined_call_operand.vmem [shape: f32[2,2,24,128], index: 0, kind: input, shape index: {}, may-alias: {0,1}]
  %s1 = inlined_call_operand.vmem [shape: f32[2,2,24,128], index: 1, kind: input, shape index: {}, may-alias: {0,1}]
  %s2 = inlined_call_operand.vmem [shape: f32[2,24,128], index: 2, kind: input, shape index: {}]
  %s3 = inlined_call_operand.hbm [shape: f32[1,1], index: 3, kind: output, shape index: {}]
  %s4 = sld [smem:[#allocation0]]
  $region106: #{binary_dice_loss.1} parent=0
    _
  %s6 = ssub.s32 1, %s4
  %s7 = scalar_select 0, %s6, %s4
  $region1: #{binary_dice_loss.1} parent=0
    #allocation4 [shape = 'u8[24576]{0}', space=vmem, size = 0x6000, scoped, tag = 'input window, operand 0, single buffered']
    #allocation5 [shape = 'u8[24576]{0}', space=vmem, size = 0x6000, scoped, tag = 'input window, operand 1, single buffered']
    #allocation6 [shape = 'u8[512]{0}', space=vmem, size = 0x400, scoped, tag = 'output window, operand 0, single buffered']
    #allocation7 [shape = 's32[1]{0}', space=sflag, size = 0x4, scoped, tag = 'scoped memory for binary_dice_loss.1']
    %8 = vsyncpa [#allocation7], 0
    // Predicated region
    $region2: #{binary_dice_loss.1} parent=1 // pred_check
      _
    $region3: #{binary_dice_loss.1} parent=1 // pred_check_branch
      %10 = sbr.rel (0) target = $region5
    $region4: #{binary_dice_loss.1} parent=1 // pred_region
      // Predicated region
      $region6: #{binary_dice_loss.1} parent=4 // pred_check
        _
      $region7: #{binary_dice_loss.1} parent=4 // pred_check_branch
        %12 = sbr.rel (0) target = $region9
      $region8: #{binary_dice_loss.1} parent=4 // pred_region
        // Predicated region
        $region10: #{binary_dice_loss.1} parent=8 // pred_check
          _
        $region11: #{binary_dice_loss.1} parent=8 // pred_check_branch
          %14 = sbr.rel (0) target = $region13
        $region12: #{binary_dice_loss.1} parent=8 // pred_region
          // Predicated region
          $region25: #{binary_dice_loss.1} parent=12 // pred_check
            _
          $region26: #{binary_dice_loss.1} parent=12 // pred_check_branch
            %39 = sbr.rel (0) target = $region28
          $region27: #{binary_dice_loss.1} parent=12 // pred_region
            loop: start=0, step=1, limit=1
            $region29: #{binary_dice_loss.1} parent=27 // loop_pre_header
              _
            $region30: #{binary_dice_loss.1} parent=27 // loop_header
              %s41 = sphi 0, %s45
              %p42 = scmp.ge.s32.totalorder %s41, 1
              %s46 = sphi %s0, %s0
              %s47 = sphi [#allocation4], [#allocation4]
            $region31: #{binary_dice_loss.1} parent=27 // loop_header_branch
              %44 = sbr.rel (%p42) target = $region35
            $region32: #{binary_dice_loss.1} parent=27 // loop_body
              %v48 = vld [vmem:[%s46] sm:$0xff]
              %49 = vst [vmem:[%s47] sm:$0xff] %v48
              %v50 = vld [vmem:[%s46 + $0x8] sm:$0xff]
              %51 = vst [vmem:[%s47 + $0x8] sm:$0xff] %v50
              %v52 = vld [vmem:[%s46 + $0x10] sm:$0xff]
              %53 = vst [vmem:[%s47 + $0x10] sm:$0xff] %v52
              %v54 = vld [vmem:[%s46 + $0x30] sm:$0xff]
              %55 = vst [vmem:[%s47 + $0x18] sm:$0xff] %v54
              %v56 = vld [vmem:[%s46 + $0x38] sm:$0xff]
              %57 = vst [vmem:[%s47 + $0x20] sm:$0xff] %v56
              %v58 = vld [vmem:[%s46 + $0x40] sm:$0xff]
              %59 = vst [vmem:[%s47 + $0x28] sm:$0xff] %v58
            $region33: #{binary_dice_loss.1} parent=27 // loop_footer
              %s45 = sadd.s32 1, %s41
            $region34: #{binary_dice_loss.1} parent=27 // loop_footer_branch
              %40 = sbr.rel target = $region30
            $region35: #{binary_dice_loss.1} parent=27 // loop_exit
              _
          $region28: #{binary_dice_loss.1} parent=12 // pred_fallthru
            _
          // Predicated region
          $region36: #{binary_dice_loss.1} parent=12 // pred_check
            _
          $region37: #{binary_dice_loss.1} parent=12 // pred_check_branch
            %61 = sbr.rel target = $region39
          $region38: #{binary_dice_loss.1} parent=12 // pred_region
            _
          $region39: #{binary_dice_loss.1} parent=12 // pred_fallthru
            _
        $region13: #{binary_dice_loss.1} parent=8 // pred_fallthru
          _
        // Predicated region
        $region14: #{binary_dice_loss.1} parent=8 // pred_check
          _
        $region15: #{binary_dice_loss.1} parent=8 // pred_check_branch
          %16 = sbr.rel target = $region17
        $region16: #{binary_dice_loss.1} parent=8 // pred_region
          loop: start=0, step=1, limit=1
          $region18: #{binary_dice_loss.1} parent=16 // loop_pre_header
            _
          $region19: #{binary_dice_loss.1} parent=16 // loop_header
            %s19 = sphi 0, %s23
            %p20 = scmp.ge.s32.totalorder %s19, 1
            %s24 = sphi %s0, %s0
            %s25 = sphi [#allocation4], [#allocation4]
          $region20: #{binary_dice_loss.1} parent=16 // loop_header_branch
            %22 = sbr.rel (%p20) target = $region24
          $region21: #{binary_dice_loss.1} parent=16 // loop_body
            %v26 = vld [vmem:[%s24] sm:$0xff]
            %27 = vst [vmem:[%s25] sm:$0xff] %v26
            %v28 = vld [vmem:[%s24 + $0x8] sm:$0xff]
            %29 = vst [vmem:[%s25 + $0x8] sm:$0xff] %v28
            %v30 = vld [vmem:[%s24 + $0x10] sm:$0xff]
            %31 = vst [vmem:[%s25 + $0x10] sm:$0xff] %v30
            %v32 = vld [vmem:[%s24 + $0x30] sm:$0xff]
            %33 = vst [vmem:[%s25 + $0x18] sm:$0xff] %v32
            %v34 = vld [vmem:[%s24 + $0x38] sm:$0xff]
            %35 = vst [vmem:[%s25 + $0x20] sm:$0xff] %v34
            %v36 = vld [vmem:[%s24 + $0x40] sm:$0xff]
            %37 = vst [vmem:[%s25 + $0x28] sm:$0xff] %v36
          $region22: #{binary_dice_loss.1} parent=16 // loop_footer
            %s23 = sadd.s32 1, %s19
          $region23: #{binary_dice_loss.1} parent=16 // loop_footer_branch
            %18 = sbr.rel target = $region19
          $region24: #{binary_dice_loss.1} parent=16 // loop_exit
            _
        $region17: #{binary_dice_loss.1} parent=8 // pred_fallthru
          _
      $region9: #{binary_dice_loss.1} parent=4 // pred_fallthru
        _
      %62 = vnop
    $region5: #{binary_dice_loss.1} parent=1 // pred_fallthru
      _
    // Predicated region
    $region40: #{binary_dice_loss.1} parent=1 // pred_check
      _
    $region41: #{binary_dice_loss.1} parent=1 // pred_check_branch
      %64 = sbr.rel (0) target = $region43
    $region42: #{binary_dice_loss.1} parent=1 // pred_region
      %s65 = scalar_lea.vmem %s1, 24
      // Predicated region
      $region44: #{binary_dice_loss.1} parent=42 // pred_check
        _
      $region45: #{binary_dice_loss.1} parent=42 // pred_check_branch
        %67 = sbr.rel (0) target = $region47
      $region46: #{binary_dice_loss.1} parent=42 // pred_region
        // Predicated region
        $region48: #{binary_dice_loss.1} parent=46 // pred_check
          _
        $region49: #{binary_dice_loss.1} parent=46 // pred_check_branch
          %69 = sbr.rel (0) target = $region51
        $region50: #{binary_dice_loss.1} parent=46 // pred_region
          // Predicated region
          $region63: #{binary_dice_loss.1} parent=50 // pred_check
            _
          $region64: #{binary_dice_loss.1} parent=50 // pred_check_branch
            %94 = sbr.rel (0) target = $region66
          $region65: #{binary_dice_loss.1} parent=50 // pred_region
            loop: start=0, step=1, limit=1
            $region67: #{binary_dice_loss.1} parent=65 // loop_pre_header
              _
            $region68: #{binary_dice_loss.1} parent=65 // loop_header
              %s96 = sphi 0, %s100
              %p97 = scmp.ge.s32.totalorder %s96, 1
              %s101 = sphi %s65, %s65
              %s102 = sphi [#allocation5], [#allocation5]
            $region69: #{binary_dice_loss.1} parent=65 // loop_header_branch
              %99 = sbr.rel (%p97) target = $region73
            $region70: #{binary_dice_loss.1} parent=65 // loop_body
              %v103 = vld [vmem:[%s101] sm:$0xff]
              %104 = vst [vmem:[%s102] sm:$0xff] %v103
              %v105 = vld [vmem:[%s101 + $0x8] sm:$0xff]
              %106 = vst [vmem:[%s102 + $0x8] sm:$0xff] %v105
              %v107 = vld [vmem:[%s101 + $0x10] sm:$0xff]
              %108 = vst [vmem:[%s102 + $0x10] sm:$0xff] %v107
              %v109 = vld [vmem:[%s101 + $0x30] sm:$0xff]
              %110 = vst [vmem:[%s102 + $0x18] sm:$0xff] %v109
              %v111 = vld [vmem:[%s101 + $0x38] sm:$0xff]
              %112 = vst [vmem:[%s102 + $0x20] sm:$0xff] %v111
              %v113 = vld [vmem:[%s101 + $0x40] sm:$0xff]
              %114 = vst [vmem:[%s102 + $0x28] sm:$0xff] %v113
            $region71: #{binary_dice_loss.1} parent=65 // loop_footer
              %s100 = sadd.s32 1, %s96
            $region72: #{binary_dice_loss.1} parent=65 // loop_footer_branch
              %95 = sbr.rel target = $region68
            $region73: #{binary_dice_loss.1} parent=65 // loop_exit
              _
          $region66: #{binary_dice_loss.1} parent=50 // pred_fallthru
            _
          // Predicated region
          $region74: #{binary_dice_loss.1} parent=50 // pred_check
            _
          $region75: #{binary_dice_loss.1} parent=50 // pred_check_branch
            %116 = sbr.rel target = $region77
          $region76: #{binary_dice_loss.1} parent=50 // pred_region
            _
          $region77: #{binary_dice_loss.1} parent=50 // pred_fallthru
            _
        $region51: #{binary_dice_loss.1} parent=46 // pred_fallthru
          _
        // Predicated region
        $region52: #{binary_dice_loss.1} parent=46 // pred_check
          _
        $region53: #{binary_dice_loss.1} parent=46 // pred_check_branch
          %71 = sbr.rel target = $region55
        $region54: #{binary_dice_loss.1} parent=46 // pred_region
          loop: start=0, step=1, limit=1
          $region56: #{binary_dice_loss.1} parent=54 // loop_pre_header
            _
          $region57: #{binary_dice_loss.1} parent=54 // loop_header
            %s74 = sphi 0, %s78
            %p75 = scmp.ge.s32.totalorder %s74, 1
            %s79 = sphi %s65, %s65
            %s80 = sphi [#allocation5], [#allocation5]
          $region58: #{binary_dice_loss.1} parent=54 // loop_header_branch
            %77 = sbr.rel (%p75) target = $region62
          $region59: #{binary_dice_loss.1} parent=54 // loop_body
            %v81 = vld [vmem:[%s79] sm:$0xff]
            %82 = vst [vmem:[%s80] sm:$0xff] %v81
            %v83 = vld [vmem:[%s79 + $0x8] sm:$0xff]
            %84 = vst [vmem:[%s80 + $0x8] sm:$0xff] %v83
            %v85 = vld [vmem:[%s79 + $0x10] sm:$0xff]
            %86 = vst [vmem:[%s80 + $0x10] sm:$0xff] %v85
            %v87 = vld [vmem:[%s79 + $0x30] sm:$0xff]
            %88 = vst [vmem:[%s80 + $0x18] sm:$0xff] %v87
            %v89 = vld [vmem:[%s79 + $0x38] sm:$0xff]
            %90 = vst [vmem:[%s80 + $0x20] sm:$0xff] %v89
            %v91 = vld [vmem:[%s79 + $0x40] sm:$0xff]
            %92 = vst [vmem:[%s80 + $0x28] sm:$0xff] %v91
          $region60: #{binary_dice_loss.1} parent=54 // loop_footer
            %s78 = sadd.s32 1, %s74
          $region61: #{binary_dice_loss.1} parent=54 // loop_footer_branch
            %73 = sbr.rel target = $region57
          $region62: #{binary_dice_loss.1} parent=54 // loop_exit
            _
        $region55: #{binary_dice_loss.1} parent=46 // pred_fallthru
          _
      $region47: #{binary_dice_loss.1} parent=42 // pred_fallthru
        _
      %117 = vnop
    $region43: #{binary_dice_loss.1} parent=1 // pred_fallthru
      _
    // Predicated region
    $region78: #{binary_dice_loss.1} parent=1 // pred_check
      _
    $region79: #{binary_dice_loss.1} parent=1 // pred_check_branch
      %119 = sbr.rel (0) target = $region81
    $region80: #{binary_dice_loss.1} parent=1 // pred_region
      _
    $region81: #{binary_dice_loss.1} parent=1 // pred_fallthru
      _
    // Predicated region
    $region82: #{binary_dice_loss.1} parent=1 // pred_check
      _
    $region83: #{binary_dice_loss.1} parent=1 // pred_check_branch
      %121 = sbr.rel (0) target = $region85
    $region84: #{binary_dice_loss.1} parent=1 // pred_region
      _
    $region85: #{binary_dice_loss.1} parent=1 // pred_fallthru
      _
    // Predicated region
    $region86: #{binary_dice_loss.1} parent=1 // pred_check
      _
    $region87: #{binary_dice_loss.1} parent=1 // pred_check_branch
      %123 = sbr.rel (0) target = $region89
    $region88: #{binary_dice_loss.1} parent=1 // pred_region
      _
    $region89: #{binary_dice_loss.1} parent=1 // pred_fallthru
      _
    %p124 = scmp.eq.s32.totalorder 0, 0
    // Predicated region
    $region90: #{binary_dice_loss.1} parent=1 // pred_check
      %p125 = pneg %p124
    $region91: #{binary_dice_loss.1} parent=1 // pred_check_branch
      %127 = sbr.rel (%p125) target = $region93
    $region92: #{binary_dice_loss.1} parent=1 // pred_region
      %128 = vst [vmem:[#allocation2] sm:$0xff] 0.0
      %129 = vst [vmem:[#allocation2 + $0x8] sm:$0xff] 0.0
      %130 = vst [vmem:[#allocation3] sm:$0xff] 0.0
      %131 = vst [vmem:[#allocation3 + $0x8] sm:$0xff] 0.0
    $region93: #{binary_dice_loss.1} parent=1 // pred_fallthru
      _
    %v132 = vld [vmem:[%s2] sm:$0xff]
    %v133 = vld [vmem:[%s2 + $0x8] sm:$0xff]
    %v134 = vld [vmem:[%s2 + $0x10] sm:$0xff]
    %v135 = vld [vmem:[%s2 + $0x18] sm:$0xff]
    %v136 = vld [vmem:[%s2 + $0x20] sm:$0xff]
    %v137 = vld [vmem:[%s2 + $0x28] sm:$0xff]
    %v138 = vld [vmem:[#allocation5] sm:$0xff]
    %v139 = vld [vmem:[#allocation5 + $0x8] sm:$0xff]
    %v140 = vld [vmem:[#allocation5 + $0x10] sm:$0xff]
    %v141 = vld [vmem:[#allocation5 + $0x18] sm:$0xff]
    %v142 = vld [vmem:[#allocation5 + $0x20] sm:$0xff]
    %v143 = vld [vmem:[#allocation5 + $0x28] sm:$0xff]
    %v144 = vld [vmem:[#allocation4] sm:$0xff]
    %v145 = vld [vmem:[#allocation4 + $0x8] sm:$0xff]
    %v146 = vld [vmem:[#allocation4 + $0x10] sm:$0xff]
    %v147 = vld [vmem:[#allocation4 + $0x18] sm:$0xff]
    %v148 = vld [vmem:[#allocation4 + $0x20] sm:$0xff]
    %v149 = vld [vmem:[#allocation4 + $0x28] sm:$0xff]
    %v150 = vsub.f32 %v138, %v144
    %v151 = vsub.f32 %v139, %v145
    %v152 = vsub.f32 %v140, %v146
    %v153 = vsub.f32 %v141, %v147
    %v154 = vsub.f32 %v142, %v148
    %v155 = vsub.f32 %v143, %v149
    %v156 = vmul.f32 %v150, 0.5
    %v157 = vmul.f32 %v151, 0.5
    %v158 = vmul.f32 %v152, 0.5
    %v159 = vmul.f32 %v153, 0.5
    %v160 = vmul.f32 %v154, 0.5
    %v161 = vmul.f32 %v155, 0.5
    %v162 = vtanh.pop %v156
    %v163 = vtanh.pop %v157
    %v164 = vtanh.pop %v158
    %v165 = vtanh.pop %v159
    %v166 = vtanh.pop %v160
    %v167 = vtanh.pop %v161
    %v168 = vadd.f32 %v162, 1.0
    %v169 = vadd.f32 %v163, 1.0
    %v170 = vadd.f32 %v164, 1.0
    %v171 = vadd.f32 %v165, 1.0
    %v172 = vadd.f32 %v166, 1.0
    %v173 = vadd.f32 %v167, 1.0
    %v174 = vmul.f32 %v168, 0.5
    %v175 = vmul.f32 %v169, 0.5
    %v176 = vmul.f32 %v170, 0.5
    %v177 = vmul.f32 %v171, 0.5
    %v178 = vmul.f32 %v172, 0.5
    %v179 = vmul.f32 %v173, 0.5
    %v180 = vmul.f32 %v174, %v132
    %v181 = vmul.f32 %v175, %v133
    %v182 = vmul.f32 %v176, %v134
    %v183 = vmul.f32 %v177, %v135
    %v184 = vmul.f32 %v178, %v136
    %v185 = vmul.f32 %v179, %v137
    %v186 = vadd.f32 %v174, %v132
    %v187 = vadd.f32 %v175, %v133
    %v188 = vadd.f32 %v176, %v134
    %v189 = vadd.f32 %v177, %v135
    %v190 = vadd.f32 %v178, %v136
    %v191 = vadd.f32 %v179, %v137
    %v192 = vld [vmem:[#allocation2] sm:$0xff]
    %v193 = vld [vmem:[#allocation2 + $0x8] sm:$0xff]
    %v194 = vadd.f32 %v180, %v181
    %v195 = vadd.f32 %v183, %v184
    %v196 = vadd.f32 %v194, %v182
    %v197 = vadd.f32 %v195, %v185
    %v198 = vadd.f32 %v192, %v196
    %v199 = vadd.f32 %v193, %v197
    %200 = vst [vmem:[#allocation2] sm:$0xff] %v198
    %201 = vst [vmem:[#allocation2 + $0x8] sm:$0xff] %v199
    %v202 = vld [vmem:[#allocation3] sm:$0xff]
    %v203 = vld [vmem:[#allocation3 + $0x8] sm:$0xff]
    %v204 = vadd.f32 %v186, %v187
    %v205 = vadd.f32 %v189, %v190
    %v206 = vadd.f32 %v204, %v188
    %v207 = vadd.f32 %v205, %v191
    %v208 = vadd.f32 %v202, %v206
    %v209 = vadd.f32 %v203, %v207
    %210 = vst [vmem:[#allocation3] sm:$0xff] %v208
    %211 = vst [vmem:[#allocation3 + $0x8] sm:$0xff] %v209
    // Predicated region
    $region94: #{binary_dice_loss.1} parent=1 // pred_check
      %p212 = pneg %p124
    $region95: #{binary_dice_loss.1} parent=1 // pred_check_branch
      %214 = sbr.rel (%p212) target = $region97
    $region96: #{binary_dice_loss.1} parent=1 // pred_region
      %v215 = vld [vmem:[#allocation2] sm:$0xff]
      %v216 = vld [vmem:[#allocation2 + $0x8] sm:$0xff]
      %v217 = vrot.slane %v215, 4
      %v218 = vadd.f32 %v215, %v217
      %v219 = vrot.slane %v218, 2
      %v220 = vadd.f32 %v218, %v219
      %v221 = vrot.slane %v220, 1
      %v222 = vadd.f32 %v220, %v221
      %v223 = vrot.slane %v216, 4
      %v224 = vadd.f32 %v216, %v223
      %v225 = vrot.slane %v224, 2
      %v226 = vadd.f32 %v224, %v225
      %v227 = vrot.slane %v226, 1
      %v228 = vadd.f32 %v226, %v227
      %vm231 = vcmask 1041409
      %v232 = vsel %vm231, %v228, %v222
      %vm234 = vcmask 1041408
      %v235 = vsel %vm234, %v232, 0.0
      %236 = vadd.xlane.f32.xlu0 %v235
      %v237 = vpop.xlane.xlu0 %236
      %v238 = vld [vmem:[#allocation3] sm:$0xff]
      %v239 = vld [vmem:[#allocation3 + $0x8] sm:$0xff]
      %v240 = vrot.slane %v238, 4
      %v241 = vadd.f32 %v238, %v240
      %v242 = vrot.slane %v241, 2
      %v243 = vadd.f32 %v241, %v242
      %v244 = vrot.slane %v243, 1
      %v245 = vadd.f32 %v243, %v244
      %v246 = vrot.slane %v239, 4
      %v247 = vadd.f32 %v239, %v246
      %v248 = vrot.slane %v247, 2
      %v249 = vadd.f32 %v247, %v248
      %v250 = vrot.slane %v249, 1
      %v251 = vadd.f32 %v249, %v250
      %v254 = vsel %vm231, %v251, %v245
      %v256 = vsel %vm234, %v254, 0.0
      %257 = vadd.xlane.f32.xlu0 %v256
      %v258 = vpop.xlane.xlu0 %257
      %v259 = vmul.f32 %v237, 2.0
      %v260 = vadd.f32 %v259, 1.0
      %v261 = vadd.f32 %v258, 1.0
      %v262 = vrcp.pop %v261
      %v263 = vmul.f32 %v260, %v262
      %v264 = vsub.f32 1.0, %v263
      %vm265 = vcmask 1024
      %v266 = vsel %vm265, %v264, 0.0
      %267 = vadd.xlane.f32.xlu0 %v266
      %v268 = vpop.xlane.xlu0 %267
      %v269 = vrot.slane %v268, 4
      %v270 = vadd.f32 %v268, %v269
      %v271 = vrot.slane %v270, 2
      %v272 = vadd.f32 %v270, %v271
      %v273 = vrot.slane %v272, 1
      %v274 = vadd.f32 %v272, %v273
      %s275 = vtos %v274
      %v276 = vstv %s275
      %v277 = vrcp.pop 2.0
      %v278 = vmul.f32 %v276, %v277
      %vm279 = vcmask 0
      %280 = vst.msk [vmem:[#allocation6] sm:$0x1] %vm279, %v278
    $region97: #{binary_dice_loss.1} parent=1 // pred_fallthru
      _
    // Predicated region
    $region98: #{binary_dice_loss.1} parent=1 // pred_check
      _
    $region99: #{binary_dice_loss.1} parent=1 // pred_check_branch
      %282 = sbr.rel (0) target = $region101
    $region100: #{binary_dice_loss.1} parent=1 // pred_region
      %s284 = ssub.s32 16, 16
      %285 = vsyncadd [#allocation7], %s284
      %s287 = sshll.u32 [#allocation6], 4
      %s288 = int_to_ptr.vmem [resolvable:$true] %s287
      %290 = dma.vmem_to_hbm [thread:$0]  %s288, 16, %s3, [#allocation7]
    $region101: #{binary_dice_loss.1} parent=1 // pred_fallthru
      _
    // Predicated region
    $region102: #{binary_dice_loss.1} parent=1 // pred_check
      _
    $region103: #{binary_dice_loss.1} parent=1 // pred_check_branch
      %292 = sbr.rel (0) target = $region105
    $region104: #{binary_dice_loss.1} parent=1 // pred_region
      %293 = dma.done [#allocation7], 16
    $region105: #{binary_dice_loss.1} parent=1 // pred_fallthru
      _
    %294 = vsyncpa [#allocation7], 1

</llo_original>
